<compile_context>
chip_gen: v5e
topology: v5e:2x2
jax: 0.10.0
libtpu: 0.0.40
codegen_flags: <defaults>
</compile_context>

<pallas_src>
import math

import jax
import jax.numpy as jnp
from jax.experimental import pallas as pl
from jax.experimental.pallas import tpu as pltpu


def _round_up(v, m):
    return ((v + m - 1) // m) * m


def _make_kernel(num_layers, n_files, use_layer_norm, neg_slope, eps):
    """Builds the Pallas kernel body.

    Kernel args (PrefetchScalarGridSpec, num_scalar_prefetch=0):
      x_ref   (d_in, block_T)        feature-major input tokens
      idx_ref (1, block_T) int32     per-token expert index
      per layer: wT_ref (n_files*d_out, d_in), b_ref (n_files*d_out, 1)
                 [+ gamma_ref, beta_ref (n_files*d_out, 1) for hidden layers]
      o_ref   (d_out_last, block_T)
    """

    def kernel(x_ref, idx_ref, *rest):
        o_ref = rest[-1]
        param_refs = rest[:-1]

        # One-hot expert masks over the token (lane) axis, computed once.
        idx_row = idx_ref[...]                                  # (1, block_T) i32
        sel = [(idx_row == f).astype(jnp.float32) for f in range(n_files)]

        h = x_ref[...].astype(jnp.float32)                      # (d_in, block_T)
        ptr = 0
        for li in range(num_layers):
            wT = param_refs[ptr][...]                           # (n_files*d_out, d_in)
            b = param_refs[ptr + 1][...]                        # (n_files*d_out, 1)
            ptr += 2
            d_out = wT.shape[0] // n_files

            # One batched MXU matmul for ALL experts and ALL tokens in the block.
            y = jnp.dot(wT, h, preferred_element_type=jnp.float32) + b

            # Per-token expert selection on the VPU (one-hot masked sum over the
            # sublane-aligned per-expert slices of y).
            h = sel[0] * y[0:d_out, :]
            for f in range(1, n_files):
                h = h + sel[f] * y[f * d_out:(f + 1) * d_out, :]

            if li < num_layers - 1:
                if use_layer_norm:
                    g = param_refs[ptr][...]                    # (n_files*d_out, 1)
                    be = param_refs[ptr + 1][...]               # (n_files*d_out, 1)
                    ptr += 2
                    gamma = sel[0] * g[0:d_out, :]
                    beta = sel[0] * be[0:d_out, :]
                    for f in range(1, n_files):
                        gamma = gamma + sel[f] * g[f * d_out:(f + 1) * d_out, :]
                        beta = beta + sel[f] * be[f * d_out:(f + 1) * d_out, :]
                    # Two-pass variance (matches reference; no cancellation).
                    mu = jnp.mean(h, axis=0, keepdims=True)     # (1, block_T)
                    c = h - mu
                    var = jnp.mean(c * c, axis=0, keepdims=True)
                    h = c * jax.lax.rsqrt(var + eps) * gamma + beta
                # leaky_relu (default negative_slope = 0.01)
                h = jnp.where(h > 0, h, neg_slope * h)
                # dropout with p = 0.0 -> identity

        o_ref[...] = h.astype(o_ref.dtype)

    return kernel


def multi_mlp_forward(x, x_idx, params, *, use_layer_norm=True,
                      neg_slope=0.01, eps=1e-5, block_tokens=512):
    """Runs MultiMLP on TPU via a single pallas_call.

    x      : (N, B, in_size) float32
    x_idx  : (N,) int32, indices into the n_files stacked MLPs
    params : list of per-layer dicts with stacked params:
             {'w': (n_files, d_in, d_out), 'b': (n_files, 1, d_out),
              ['gamma': (n_files, 1, d_out), 'beta': (n_files, 1, d_out)]}
    """
    N, B, Din = x.shape
    L = len(params)
    n_files = params[0]["w"].shape[0]
    Dout = params[-1]["w"].shape[-1]

    # Flatten samples x batch into one token axis; keep tokens on the lane dim.
    T = N * B
    block_tokens = max(128, min(int(block_tokens), _round_up(T, 128)))
    block_tokens = _round_up(block_tokens, 128)
    T_pad = _round_up(T, block_tokens)
    num_blocks = T_pad // block_tokens

    # Feature-major (lane-dense) input: (Din, T_pad).  Padded tokens run with
    # expert 0 and are sliced off afterwards (wasted-but-harmless work).
    xt = x.reshape(T, Din).T
    idx_tok = jnp.repeat(x_idx.astype(jnp.int32), B)
    if T_pad != T:
        xt = jnp.pad(xt, ((0, 0), (0, T_pad - T)))
        idx_tok = jnp.pad(idx_tok, (0, T_pad - T))
    idx_tok = idx_tok.reshape(1, T_pad)

    def tok_map(i):
        return (0, i)

    def const_map(i):
        del i
        return (0, 0)

    flat_params = []
    in_specs = [
        pl.BlockSpec((Din, block_tokens), tok_map),
        pl.BlockSpec((1, block_tokens), tok_map),
    ]
    for li, p in enumerate(params):
        w = p["w"]                                   # (n_files, d_in, d_out)
        d_in, d_out = w.shape[1], w.shape[2]
        # Concatenate all experts along the output dim, transposed for the
        # feature-major matmul: row f*d_out + d  <->  W[f, :, d].
        wT = jnp.transpose(w, (0, 2, 1)).reshape(n_files * d_out, d_in)
        b = p["b"].reshape(n_files * d_out, 1)
        flat_params += [wT, b]
        # Full-array blocks with constant index_map -> DMA'd once, VMEM-resident.
        in_specs += [pl.BlockSpec(wT.shape, const_map),
                     pl.BlockSpec(b.shape, const_map)]
        if use_layer_norm and li < L - 1:
            g = p["gamma"].reshape(n_files * d_out, 1)
            be = p["beta"].reshape(n_files * d_out, 1)
            flat_params += [g, be]
            in_specs += [pl.BlockSpec(g.shape, const_map),
                         pl.BlockSpec(be.shape, const_map)]

    kernel = _make_kernel(L, n_files, use_layer_norm, neg_slope, eps)

    grid_spec = pltpu.PrefetchScalarGridSpec(
        num_scalar_prefetch=0,
        grid=(num_blocks,),
        in_specs=in_specs,
        out_specs=pl.BlockSpec((Dout, block_tokens), tok_map),
    )

    out = pl.pallas_call(
        kernel,
        out_shape=jax.ShapeDtypeStruct((Dout, T_pad), x.dtype),
        grid_spec=grid_spec,
        compiler_params=pltpu.CompilerParams(
            # Disjoint output tiles per grid step -> safe to shard across the
            # two TensorCores on v7x; neutral on v5e/v6e.
            dimension_semantics=("parallel",),
            # Explicit scoped-VMEM headroom (v5e default is only 16 MiB);
            # well within v7x's 64 MiB physical VMEM at these sizes.
            vmem_limit_bytes=32 * 1024 * 1024),
    )(xt, idx_tok, *flat_params)

    # Back to sample-major layout.
    return out[:, :T].T.reshape(N, B, Dout)


def init_params(key, n_files, feats, use_layer_norm=True):
    """Deterministic param init (PyTorch-Linear-style uniform bounds).

    gamma/beta are randomized (instead of torch's ones/zeros default) so the
    per-expert LayerNorm selection is actually exercised by the test."""
    params = []
    L = len(feats) - 1
    for li in range(L):
        d_in, d_out = feats[li], feats[li + 1]
        key, kw, kb = jax.random.split(key, 3)
        bound = 1.0 / math.sqrt(d_in)
        w = jax.random.uniform(kw, (n_files, d_in, d_out), jnp.float32,
                               -bound, bound)
        b = jax.random.uniform(kb, (n_files, 1, d_out), jnp.float32,
                               -bound, bound)
        layer = {"w": w, "b": b}
        if use_layer_norm and li < L - 1:
            key, kg, kbe = jax.random.split(key, 3)
            layer["gamma"] = jax.random.uniform(kg, (n_files, 1, d_out),
                                                jnp.float32, 0.5, 1.5)
            layer["beta"] = jax.random.uniform(kbe, (n_files, 1, d_out),
                                               jnp.float32, -0.1, 0.1)
        params.append(layer)
    return params


def reference_forward(x, x_idx, params, *, use_layer_norm=True,
                      neg_slope=0.01, eps=1e-5):
    """Pure-JAX reference matching the PyTorch MultiMLP forward."""
    L = len(params)
    outs = []
    for n in range(x.shape[0]):
        idx = int(x_idx[n])
        h = x[n]
        for li in range(L):
            w = params[li]["w"][idx]
            b = params[li]["b"][idx][0]
            h = h @ w + b
            if li < L - 1:
                if use_layer_norm:
                    g = params[li]["gamma"][idx][0]
                    be = params[li]["beta"][idx][0]
                    mu = jnp.mean(h, axis=-1, keepdims=True)
                    var = jnp.mean((h - mu) ** 2, axis=-1, keepdims=True)
                    h = (h - mu) / jnp.sqrt(var + eps) * g + be
                h = jnp.where(h > 0, h, neg_slope * h)
        outs.append(h)
    return jnp.stack(outs)


if __name__ == "__main__":
    # config: in_size=16, hidden_size=[32, 32], out_size=8, n_files=3,
    #         dropout=0.0, layer_norm=True
    n_files = 3
    feats = [16, 32, 32, 8]
    N, B = 5, 8          # 40 tokens -> one 128-lane token block (exercises padding)

    key = jax.random.PRNGKey(0)
    key, kx, ki = jax.random.split(key, 3)
    x = jax.random.normal(kx, (N, B, feats[0]), jnp.float32)
    x_idx = jax.random.randint(ki, (N,), 0, n_files, dtype=jnp.int32)

    params = init_params(key, n_files, feats, use_layer_norm=True)

    out = multi_mlp_forward(x, x_idx, params, use_layer_norm=True)
    out = jax.block_until_ready(out)

    ref = reference_forward(x, x_idx, params, use_layer_norm=True)
    assert out.shape == (N, B, feats[-1])
    assert jnp.allclose(out, ref, atol=1e-4, rtol=1e-4), "mismatch vs reference"

    print("KERNEL_OK")
</pallas_src>

<mosaic_0001>
module attributes {stable_mosaic.version = 11 : i64} {
  func.func @kernel(%arg0: i32, %arg1: memref<16x128xf32, #tpu.memory_space<vmem>>, %arg2: memref<1x128xi32, #tpu.memory_space<vmem>>, %arg3: memref<96x16xf32, #tpu.memory_space<vmem>>, %arg4: memref<96x1xf32, #tpu.memory_space<vmem>>, %arg5: memref<96x1xf32, #tpu.memory_space<vmem>>, %arg6: memref<96x1xf32, #tpu.memory_space<vmem>>, %arg7: memref<96x32xf32, #tpu.memory_space<vmem>>, %arg8: memref<96x1xf32, #tpu.memory_space<vmem>>, %arg9: memref<96x1xf32, #tpu.memory_space<vmem>>, %arg10: memref<96x1xf32, #tpu.memory_space<vmem>>, %arg11: memref<24x32xf32, #tpu.memory_space<vmem>>, %arg12: memref<24x1xf32, #tpu.memory_space<vmem>>, %arg13: memref<8x128xf32, #tpu.memory_space<vmem>>) attributes {dimension_semantics = [#tpu.dimension_semantics<parallel>], iteration_bounds = array<i64: 1>, scalar_prefetch = 0 : i64, scratch_operands = 0 : i64, tpu.core_type = #tpu.core_type<tc>, window_params = [{transform_indices = @transform_0, window_bounds = array<i64: 16, 128>}, {transform_indices = @transform_1, window_bounds = array<i64: 1, 128>}, {pipeline_mode = #tpu.pipeline_mode<synchronous>, transform_indices = @transform_2, window_bounds = array<i64: 96, 16>}, {pipeline_mode = #tpu.pipeline_mode<synchronous>, transform_indices = @transform_3, window_bounds = array<i64: 96, 1>}, {pipeline_mode = #tpu.pipeline_mode<synchronous>, transform_indices = @transform_4, window_bounds = array<i64: 96, 1>}, {pipeline_mode = #tpu.pipeline_mode<synchronous>, transform_indices = @transform_5, window_bounds = array<i64: 96, 1>}, {pipeline_mode = #tpu.pipeline_mode<synchronous>, transform_indices = @transform_6, window_bounds = array<i64: 96, 32>}, {pipeline_mode = #tpu.pipeline_mode<synchronous>, transform_indices = @transform_7, window_bounds = array<i64: 96, 1>}, {pipeline_mode = #tpu.pipeline_mode<synchronous>, transform_indices = @transform_8, window_bounds = array<i64: 96, 1>}, {pipeline_mode = #tpu.pipeline_mode<synchronous>, transform_indices = @transform_9, window_bounds = array<i64: 96, 1>}, {pipeline_mode = #tpu.pipeline_mode<synchronous>, transform_indices = @transform_10, window_bounds = array<i64: 24, 32>}, {pipeline_mode = #tpu.pipeline_mode<synchronous>, transform_indices = @transform_11, window_bounds = array<i64: 24, 1>}, {transform_indices = @transform_12, window_bounds = array<i64: 8, 128>}]} {
    %c0 = arith.constant 0 : index
    %c0_0 = arith.constant 0 : index
    %0 = vector.load %arg2[%c0, %c0_0] : memref<1x128xi32, #tpu.memory_space<vmem>>, vector<1x128xi32>
    %c0_i32 = arith.constant 0 : i32
    %1 = vector.broadcast %c0_i32 : i32 to vector<1x128xi32>
    %2 = arith.cmpi eq, %0, %1 : vector<1x128xi32>
    %3 = arith.extui %2 : vector<1x128xi1> to vector<1x128xi32>
    %4 = arith.sitofp %3 : vector<1x128xi32> to vector<1x128xf32>
    %c1_i32 = arith.constant 1 : i32
    %5 = vector.broadcast %c1_i32 : i32 to vector<1x128xi32>
    %6 = arith.cmpi eq, %0, %5 : vector<1x128xi32>
    %7 = arith.extui %6 : vector<1x128xi1> to vector<1x128xi32>
    %8 = arith.sitofp %7 : vector<1x128xi32> to vector<1x128xf32>
    %c2_i32 = arith.constant 2 : i32
    %9 = vector.broadcast %c2_i32 : i32 to vector<1x128xi32>
    %10 = arith.cmpi eq, %0, %9 : vector<1x128xi32>
    %11 = arith.extui %10 : vector<1x128xi1> to vector<1x128xi32>
    %12 = arith.sitofp %11 : vector<1x128xi32> to vector<1x128xf32>
    %c0_1 = arith.constant 0 : index
    %c0_2 = arith.constant 0 : index
    %13 = vector.load %arg1[%c0_1, %c0_2] : memref<16x128xf32, #tpu.memory_space<vmem>>, vector<16x128xf32>
    %c0_3 = arith.constant 0 : index
    %c0_4 = arith.constant 0 : index
    %14 = vector.load %arg3[%c0_3, %c0_4] : memref<96x16xf32, #tpu.memory_space<vmem>>, vector<96x16xf32>
    %c0_5 = arith.constant 0 : index
    %c0_6 = arith.constant 0 : index
    %15 = vector.load %arg4[%c0_5, %c0_6] : memref<96x1xf32, #tpu.memory_space<vmem>>, vector<96x1xf32>
    %cst = arith.constant dense<0.000000e+00> : vector<96x128xf32>
    %16 = tpu.matmul %14, %13, %cst {dimension_numbers = #tpu.dot_dimension_numbers<[1], [0], [0], [1], [0, 0, 1, 1], [], []>} : vector<96x16xf32>, vector<16x128xf32>, vector<96x128xf32> -> vector<96x128xf32>
    %17 = vector.broadcast %15 : vector<96x1xf32> to vector<96x128xf32>
    %18 = arith.addf %16, %17 : vector<96x128xf32>
    %19 = vector.extract_strided_slice %18 {offsets = [0, 0], sizes = [32, 128], strides = [1, 1]} : vector<96x128xf32> to vector<32x128xf32>
    %20 = vector.broadcast %4 : vector<1x128xf32> to vector<32x128xf32>
    %21 = arith.mulf %20, %19 : vector<32x128xf32>
    %22 = vector.extract_strided_slice %18 {offsets = [32, 0], sizes = [32, 128], strides = [1, 1]} : vector<96x128xf32> to vector<32x128xf32>
    %23 = vector.broadcast %8 : vector<1x128xf32> to vector<32x128xf32>
    %24 = arith.mulf %23, %22 : vector<32x128xf32>
    %25 = arith.addf %21, %24 : vector<32x128xf32>
    %26 = vector.extract_strided_slice %18 {offsets = [64, 0], sizes = [32, 128], strides = [1, 1]} : vector<96x128xf32> to vector<32x128xf32>
    %27 = vector.broadcast %12 : vector<1x128xf32> to vector<32x128xf32>
    %28 = arith.mulf %27, %26 : vector<32x128xf32>
    %29 = arith.addf %25, %28 : vector<32x128xf32>
    %c0_7 = arith.constant 0 : index
    %c0_8 = arith.constant 0 : index
    %30 = vector.load %arg5[%c0_7, %c0_8] : memref<96x1xf32, #tpu.memory_space<vmem>>, vector<96x1xf32>
    %c0_9 = arith.constant 0 : index
    %c0_10 = arith.constant 0 : index
    %31 = vector.load %arg6[%c0_9, %c0_10] : memref<96x1xf32, #tpu.memory_space<vmem>>, vector<96x1xf32>
    %32 = vector.extract_strided_slice %30 {offsets = [0, 0], sizes = [32, 1], strides = [1, 1]} : vector<96x1xf32> to vector<32x1xf32>
    %33 = vector.broadcast %4 : vector<1x128xf32> to vector<32x128xf32>
    %34 = vector.broadcast %32 : vector<32x1xf32> to vector<32x128xf32>
    %35 = arith.mulf %33, %34 : vector<32x128xf32>
    %36 = vector.extract_strided_slice %31 {offsets = [0, 0], sizes = [32, 1], strides = [1, 1]} : vector<96x1xf32> to vector<32x1xf32>
    %37 = vector.broadcast %4 : vector<1x128xf32> to vector<32x128xf32>
    %38 = vector.broadcast %36 : vector<32x1xf32> to vector<32x128xf32>
    %39 = arith.mulf %37, %38 : vector<32x128xf32>
    %40 = vector.extract_strided_slice %30 {offsets = [32, 0], sizes = [32, 1], strides = [1, 1]} : vector<96x1xf32> to vector<32x1xf32>
    %41 = vector.broadcast %8 : vector<1x128xf32> to vector<32x128xf32>
    %42 = vector.broadcast %40 : vector<32x1xf32> to vector<32x128xf32>
    %43 = arith.mulf %41, %42 : vector<32x128xf32>
    %44 = arith.addf %35, %43 : vector<32x128xf32>
    %45 = vector.extract_strided_slice %31 {offsets = [32, 0], sizes = [32, 1], strides = [1, 1]} : vector<96x1xf32> to vector<32x1xf32>
    %46 = vector.broadcast %8 : vector<1x128xf32> to vector<32x128xf32>
    %47 = vector.broadcast %45 : vector<32x1xf32> to vector<32x128xf32>
    %48 = arith.mulf %46, %47 : vector<32x128xf32>
    %49 = arith.addf %39, %48 : vector<32x128xf32>
    %50 = vector.extract_strided_slice %30 {offsets = [64, 0], sizes = [32, 1], strides = [1, 1]} : vector<96x1xf32> to vector<32x1xf32>
    %51 = vector.broadcast %12 : vector<1x128xf32> to vector<32x128xf32>
    %52 = vector.broadcast %50 : vector<32x1xf32> to vector<32x128xf32>
    %53 = arith.mulf %51, %52 : vector<32x128xf32>
    %54 = arith.addf %44, %53 : vector<32x128xf32>
    %55 = vector.extract_strided_slice %31 {offsets = [64, 0], sizes = [32, 1], strides = [1, 1]} : vector<96x1xf32> to vector<32x1xf32>
    %56 = vector.broadcast %12 : vector<1x128xf32> to vector<32x128xf32>
    %57 = vector.broadcast %55 : vector<32x1xf32> to vector<32x128xf32>
    %58 = arith.mulf %56, %57 : vector<32x128xf32>
    %59 = arith.addf %49, %58 : vector<32x128xf32>
    %cst_11 = arith.constant dense<0.000000e+00> : vector<128xf32>
    %60 = vector.multi_reduction <add>, %29, %cst_11 [0] : vector<32x128xf32> to vector<128xf32>
    %61 = vector.shape_cast %60 : vector<128xf32> to vector<1x128xf32>
    %cst_12 = arith.constant 3.200000e+01 : f32
    %62 = vector.broadcast %cst_12 : f32 to vector<1x128xf32>
    %63 = arith.divf %61, %62 : vector<1x128xf32>
    %64 = vector.broadcast %63 : vector<1x128xf32> to vector<32x128xf32>
    %65 = arith.subf %29, %64 : vector<32x128xf32>
    %66 = arith.mulf %65, %65 : vector<32x128xf32>
    %cst_13 = arith.constant dense<0.000000e+00> : vector<128xf32>
    %67 = vector.multi_reduction <add>, %66, %cst_13 [0] : vector<32x128xf32> to vector<128xf32>
    %68 = vector.shape_cast %67 : vector<128xf32> to vector<1x128xf32>
    %cst_14 = arith.constant 3.200000e+01 : f32
    %69 = vector.broadcast %cst_14 : f32 to vector<1x128xf32>
    %70 = arith.divf %68, %69 : vector<1x128xf32>
    %cst_15 = arith.constant 9.99999974E-6 : f32
    %71 = vector.broadcast %cst_15 : f32 to vector<1x128xf32>
    %72 = arith.addf %70, %71 : vector<1x128xf32>
    %73 = math.rsqrt %72 : vector<1x128xf32>
    %74 = vector.broadcast %73 : vector<1x128xf32> to vector<32x128xf32>
    %75 = arith.mulf %65, %74 : vector<32x128xf32>
    %76 = arith.mulf %75, %54 : vector<32x128xf32>
    %77 = arith.addf %76, %59 : vector<32x128xf32>
    %cst_16 = arith.constant 0.000000e+00 : f32
    %78 = vector.broadcast %cst_16 : f32 to vector<32x128xf32>
    %79 = arith.cmpf ogt, %77, %78 : vector<32x128xf32>
    %cst_17 = arith.constant 0.00999999977 : f32
    %80 = vector.broadcast %cst_17 : f32 to vector<32x128xf32>
    %81 = arith.mulf %80, %77 : vector<32x128xf32>
    %82 = arith.select %79, %77, %81 : vector<32x128xi1>, vector<32x128xf32>
    %c0_18 = arith.constant 0 : index
    %c0_19 = arith.constant 0 : index
    %83 = vector.load %arg7[%c0_18, %c0_19] : memref<96x32xf32, #tpu.memory_space<vmem>>, vector<96x32xf32>
    %c0_20 = arith.constant 0 : index
    %c0_21 = arith.constant 0 : index
    %84 = vector.load %arg8[%c0_20, %c0_21] : memref<96x1xf32, #tpu.memory_space<vmem>>, vector<96x1xf32>
    %cst_22 = arith.constant dense<0.000000e+00> : vector<96x128xf32>
    %85 = tpu.matmul %83, %82, %cst_22 {dimension_numbers = #tpu.dot_dimension_numbers<[1], [0], [0], [1], [0, 0, 1, 1], [], []>} : vector<96x32xf32>, vector<32x128xf32>, vector<96x128xf32> -> vector<96x128xf32>
    %86 = vector.broadcast %84 : vector<96x1xf32> to vector<96x128xf32>
    %87 = arith.addf %85, %86 : vector<96x128xf32>
    %88 = vector.extract_strided_slice %87 {offsets = [0, 0], sizes = [32, 128], strides = [1, 1]} : vector<96x128xf32> to vector<32x128xf32>
    %89 = vector.broadcast %4 : vector<1x128xf32> to vector<32x128xf32>
    %90 = arith.mulf %89, %88 : vector<32x128xf32>
    %91 = vector.extract_strided_slice %87 {offsets = [32, 0], sizes = [32, 128], strides = [1, 1]} : vector<96x128xf32> to vector<32x128xf32>
    %92 = vector.broadcast %8 : vector<1x128xf32> to vector<32x128xf32>
    %93 = arith.mulf %92, %91 : vector<32x128xf32>
    %94 = arith.addf %90, %93 : vector<32x128xf32>
    %95 = vector.extract_strided_slice %87 {offsets = [64, 0], sizes = [32, 128], strides = [1, 1]} : vector<96x128xf32> to vector<32x128xf32>
    %96 = vector.broadcast %12 : vector<1x128xf32> to vector<32x128xf32>
    %97 = arith.mulf %96, %95 : vector<32x128xf32>
    %98 = arith.addf %94, %97 : vector<32x128xf32>
    %c0_23 = arith.constant 0 : index
    %c0_24 = arith.constant 0 : index
    %99 = vector.load %arg9[%c0_23, %c0_24] : memref<96x1xf32, #tpu.memory_space<vmem>>, vector<96x1xf32>
    %c0_25 = arith.constant 0 : index
    %c0_26 = arith.constant 0 : index
    %100 = vector.load %arg10[%c0_25, %c0_26] : memref<96x1xf32, #tpu.memory_space<vmem>>, vector<96x1xf32>
    %101 = vector.extract_strided_slice %99 {offsets = [0, 0], sizes = [32, 1], strides = [1, 1]} : vector<96x1xf32> to vector<32x1xf32>
    %102 = vector.broadcast %4 : vector<1x128xf32> to vector<32x128xf32>
    %103 = vector.broadcast %101 : vector<32x1xf32> to vector<32x128xf32>
    %104 = arith.mulf %102, %103 : vector<32x128xf32>
    %105 = vector.extract_strided_slice %100 {offsets = [0, 0], sizes = [32, 1], strides = [1, 1]} : vector<96x1xf32> to vector<32x1xf32>
    %106 = vector.broadcast %4 : vector<1x128xf32> to vector<32x128xf32>
    %107 = vector.broadcast %105 : vector<32x1xf32> to vector<32x128xf32>
    %108 = arith.mulf %106, %107 : vector<32x128xf32>
    %109 = vector.extract_strided_slice %99 {offsets = [32, 0], sizes = [32, 1], strides = [1, 1]} : vector<96x1xf32> to vector<32x1xf32>
    %110 = vector.broadcast %8 : vector<1x128xf32> to vector<32x128xf32>
    %111 = vector.broadcast %109 : vector<32x1xf32> to vector<32x128xf32>
    %112 = arith.mulf %110, %111 : vector<32x128xf32>
    %113 = arith.addf %104, %112 : vector<32x128xf32>
    %114 = vector.extract_strided_slice %100 {offsets = [32, 0], sizes = [32, 1], strides = [1, 1]} : vector<96x1xf32> to vector<32x1xf32>
    %115 = vector.broadcast %8 : vector<1x128xf32> to vector<32x128xf32>
    %116 = vector.broadcast %114 : vector<32x1xf32> to vector<32x128xf32>
    %117 = arith.mulf %115, %116 : vector<32x128xf32>
    %118 = arith.addf %108, %117 : vector<32x128xf32>
    %119 = vector.extract_strided_slice %99 {offsets = [64, 0], sizes = [32, 1], strides = [1, 1]} : vector<96x1xf32> to vector<32x1xf32>
    %120 = vector.broadcast %12 : vector<1x128xf32> to vector<32x128xf32>
    %121 = vector.broadcast %119 : vector<32x1xf32> to vector<32x128xf32>
    %122 = arith.mulf %120, %121 : vector<32x128xf32>
    %123 = arith.addf %113, %122 : vector<32x128xf32>
    %124 = vector.extract_strided_slice %100 {offsets = [64, 0], sizes = [32, 1], strides = [1, 1]} : vector<96x1xf32> to vector<32x1xf32>
    %125 = vector.broadcast %12 : vector<1x128xf32> to vector<32x128xf32>
    %126 = vector.broadcast %124 : vector<32x1xf32> to vector<32x128xf32>
    %127 = arith.mulf %125, %126 : vector<32x128xf32>
    %128 = arith.addf %118, %127 : vector<32x128xf32>
    %cst_27 = arith.constant dense<0.000000e+00> : vector<128xf32>
    %129 = vector.multi_reduction <add>, %98, %cst_27 [0] : vector<32x128xf32> to vector<128xf32>
    %130 = vector.shape_cast %129 : vector<128xf32> to vector<1x128xf32>
    %cst_28 = arith.constant 3.200000e+01 : f32
    %131 = vector.broadcast %cst_28 : f32 to vector<1x128xf32>
    %132 = arith.divf %130, %131 : vector<1x128xf32>
    %133 = vector.broadcast %132 : vector<1x128xf32> to vector<32x128xf32>
    %134 = arith.subf %98, %133 : vector<32x128xf32>
    %135 = arith.mulf %134, %134 : vector<32x128xf32>
    %cst_29 = arith.constant dense<0.000000e+00> : vector<128xf32>
    %136 = vector.multi_reduction <add>, %135, %cst_29 [0] : vector<32x128xf32> to vector<128xf32>
    %137 = vector.shape_cast %136 : vector<128xf32> to vector<1x128xf32>
    %cst_30 = arith.constant 3.200000e+01 : f32
    %138 = vector.broadcast %cst_30 : f32 to vector<1x128xf32>
    %139 = arith.divf %137, %138 : vector<1x128xf32>
    %cst_31 = arith.constant 9.99999974E-6 : f32
    %140 = vector.broadcast %cst_31 : f32 to vector<1x128xf32>
    %141 = arith.addf %139, %140 : vector<1x128xf32>
    %142 = math.rsqrt %141 : vector<1x128xf32>
    %143 = vector.broadcast %142 : vector<1x128xf32> to vector<32x128xf32>
    %144 = arith.mulf %134, %143 : vector<32x128xf32>
    %145 = arith.mulf %144, %123 : vector<32x128xf32>
    %146 = arith.addf %145, %128 : vector<32x128xf32>
    %cst_32 = arith.constant 0.000000e+00 : f32
    %147 = vector.broadcast %cst_32 : f32 to vector<32x128xf32>
    %148 = arith.cmpf ogt, %146, %147 : vector<32x128xf32>
    %cst_33 = arith.constant 0.00999999977 : f32
    %149 = vector.broadcast %cst_33 : f32 to vector<32x128xf32>
    %150 = arith.mulf %149, %146 : vector<32x128xf32>
    %151 = arith.select %148, %146, %150 : vector<32x128xi1>, vector<32x128xf32>
    %c0_34 = arith.constant 0 : index
    %c0_35 = arith.constant 0 : index
    %152 = vector.load %arg11[%c0_34, %c0_35] : memref<24x32xf32, #tpu.memory_space<vmem>>, vector<24x32xf32>
    %c0_36 = arith.constant 0 : index
    %c0_37 = arith.constant 0 : index
    %153 = vector.load %arg12[%c0_36, %c0_37] : memref<24x1xf32, #tpu.memory_space<vmem>>, vector<24x1xf32>
    %cst_38 = arith.constant dense<0.000000e+00> : vector<24x128xf32>
    %154 = tpu.matmul %152, %151, %cst_38 {dimension_numbers = #tpu.dot_dimension_numbers<[1], [0], [0], [1], [0, 0, 1, 1], [], []>} : vector<24x32xf32>, vector<32x128xf32>, vector<24x128xf32> -> vector<24x128xf32>
    %155 = vector.broadcast %153 : vector<24x1xf32> to vector<24x128xf32>
    %156 = arith.addf %154, %155 : vector<24x128xf32>
    %157 = vector.extract_strided_slice %156 {offsets = [0, 0], sizes = [8, 128], strides = [1, 1]} : vector<24x128xf32> to vector<8x128xf32>
    %158 = vector.broadcast %4 : vector<1x128xf32> to vector<8x128xf32>
    %159 = arith.mulf %158, %157 : vector<8x128xf32>
    %160 = vector.extract_strided_slice %156 {offsets = [8, 0], sizes = [8, 128], strides = [1, 1]} : vector<24x128xf32> to vector<8x128xf32>
    %161 = vector.broadcast %8 : vector<1x128xf32> to vector<8x128xf32>
    %162 = arith.mulf %161, %160 : vector<8x128xf32>
    %163 = arith.addf %159, %162 : vector<8x128xf32>
    %164 = vector.extract_strided_slice %156 {offsets = [16, 0], sizes = [8, 128], strides = [1, 1]} : vector<24x128xf32> to vector<8x128xf32>
    %165 = vector.broadcast %12 : vector<1x128xf32> to vector<8x128xf32>
    %166 = arith.mulf %165, %164 : vector<8x128xf32>
    %167 = arith.addf %163, %166 : vector<8x128xf32>
    %c0_39 = arith.constant 0 : index
    %c0_40 = arith.constant 0 : index
    %168 = vector.load %arg13[%c0_39, %c0_40] : memref<8x128xf32, #tpu.memory_space<vmem>>, vector<8x128xf32>
    tpu.vector_store %arg13[%c0_39, %c0_40], %167 {strides = array<i32>} : memref<8x128xf32, #tpu.memory_space<vmem>>, vector<8x128xf32>,
    return
  }
  func.func @transform_0(%arg0: i32) -> (i32, i32) {
    %c0_i32 = arith.constant 0 : i32
    %c0_i32_0 = arith.constant 0 : i32
    return %c0_i32, %arg0 : i32, i32
  }
  func.func @transform_1(%arg0: i32) -> (i32, i32) {
    %c0_i32 = arith.constant 0 : i32
    %c0_i32_0 = arith.constant 0 : i32
    return %c0_i32, %arg0 : i32, i32
  }
  func.func @transform_2(%arg0: i32) -> (i32, i32) {
    %c0_i32 = arith.constant 0 : i32
    %c0_i32_0 = arith.constant 0 : i32
    %c0_i32_1 = arith.constant 0 : i32
    return %c0_i32, %c0_i32_0 : i32, i32
  }
  func.func @transform_3(%arg0: i32) -> (i32, i32) {
    %c0_i32 = arith.constant 0 : i32
    %c0_i32_0 = arith.constant 0 : i32
    %c0_i32_1 = arith.constant 0 : i32
    return %c0_i32, %c0_i32_0 : i32, i32
  }
  func.func @transform_4(%arg0: i32) -> (i32, i32) {
    %c0_i32 = arith.constant 0 : i32
    %c0_i32_0 = arith.constant 0 : i32
    %c0_i32_1 = arith.constant 0 : i32
    return %c0_i32, %c0_i32_0 : i32, i32
  }
  func.func @transform_5(%arg0: i32) -> (i32, i32) {
    %c0_i32 = arith.constant 0 : i32
    %c0_i32_0 = arith.constant 0 : i32
    %c0_i32_1 = arith.constant 0 : i32
    return %c0_i32, %c0_i32_0 : i32, i32
  }
  func.func @transform_6(%arg0: i32) -> (i32, i32) {
    %c0_i32 = arith.constant 0 : i32
    %c0_i32_0 = arith.constant 0 : i32
    %c0_i32_1 = arith.constant 0 : i32
    return %c0_i32, %c0_i32_0 : i32, i32
  }
  func.func @transform_7(%arg0: i32) -> (i32, i32) {
    %c0_i32 = arith.constant 0 : i32
    %c0_i32_0 = arith.constant 0 : i32
    %c0_i32_1 = arith.constant 0 : i32
    return %c0_i32, %c0_i32_0 : i32, i32
  }
  func.func @transform_8(%arg0: i32) -> (i32, i32) {
    %c0_i32 = arith.constant 0 : i32
    %c0_i32_0 = arith.constant 0 : i32
    %c0_i32_1 = arith.constant 0 : i32
    return %c0_i32, %c0_i32_0 : i32, i32
  }
  func.func @transform_9(%arg0: i32) -> (i32, i32) {
    %c0_i32 = arith.constant 0 : i32
    %c0_i32_0 = arith.constant 0 : i32
    %c0_i32_1 = arith.constant 0 : i32
    return %c0_i32, %c0_i32_0 : i32, i32
  }
  func.func @transform_10(%arg0: i32) -> (i32, i32) {
    %c0_i32 = arith.constant 0 : i32
    %c0_i32_0 = arith.constant 0 : i32
    %c0_i32_1 = arith.constant 0 : i32
    return %c0_i32, %c0_i32_0 : i32, i32
  }
  func.func @transform_11(%arg0: i32) -> (i32, i32) {
    %c0_i32 = arith.constant 0 : i32
    %c0_i32_0 = arith.constant 0 : i32
    %c0_i32_1 = arith.constant 0 : i32
    return %c0_i32, %c0_i32_0 : i32, i32
  }
  func.func @transform_12(%arg0: i32) -> (i32, i32) {
    %c0_i32 = arith.constant 0 : i32
    %c0_i32_0 = arith.constant 0 : i32
    return %c0_i32, %arg0 : i32, i32
  }
}

</mosaic_0001>

<llo_original>
// kernel: tpu_custom_call.1
$region0: #{tpu_custom_call.1}
  #allocation0 [shape = 'u32[]', space=smem, size = 0x4, offset = 0x4, fixed_abs, tag = 'smem constant byte address 0x4 - core index']
  #allocation1 [shape = 'u32[72,128]{1,0:T(1,128)}', space=vmem, size = 0x9000, scoped, tag = 'internal scratch']
  %s0 = inlined_call_operand.vmem [shape: f32[16,128], index: 0, kind: input, shape index: {}]
  %s1 = inlined_call_operand.vmem [shape: s32[1,128], index: 1, kind: input, shape index: {}]
  %s2 = inlined_call_operand.vmem [shape: f32[96,16], index: 2, kind: input, shape index: {}]
  %s3 = inlined_call_operand.vmem [shape: f32[96,1], index: 3, kind: input, shape index: {}]
  %s4 = inlined_call_operand.vmem [shape: f32[96,1], index: 4, kind: input, shape index: {}]
  %s5 = inlined_call_operand.vmem [shape: f32[96,1], index: 5, kind: input, shape index: {}]
  %s6 = inlined_call_operand.vmem [shape: f32[96,32], index: 6, kind: input, shape index: {}]
  %s7 = inlined_call_operand.vmem [shape: f32[96,1], index: 7, kind: input, shape index: {}]
  %s8 = inlined_call_operand.vmem [shape: f32[96,1], index: 8, kind: input, shape index: {}]
  %s9 = inlined_call_operand.vmem [shape: f32[96,1], index: 9, kind: input, shape index: {}]
  %s10 = inlined_call_operand.vmem [shape: f32[24,32], index: 10, kind: input, shape index: {}]
  %s11 = inlined_call_operand.vmem [shape: f32[24,1], index: 11, kind: input, shape index: {}]
  %s12 = inlined_call_operand.hbm [shape: f32[8,128], index: 12, kind: output, shape index: {}]
  %s13 = sld [smem:[#allocation0]]
  $region58: #{tpu_custom_call.1} parent=0
    _
  %s15 = ssub.s32 1, %s13
  %s16 = scalar_select 0, %s15, %s13
  $region1: #{tpu_custom_call.1} parent=0
    #allocation2 [shape = 'u8[4096]{0}', space=vmem, size = 0x1000, scoped, tag = 'output window, operand 0, single buffered']
    #allocation3 [shape = 's32[1]{0}', space=sflag, size = 0x4, scoped, tag = 'scoped memory for tpu_custom_call.1']
    %17 = vsyncpa [#allocation3], 0
    // Predicated region
    $region2: #{tpu_custom_call.1} parent=1 // pred_check
      _
    $region3: #{tpu_custom_call.1} parent=1 // pred_check_branch
      %19 = sbr.rel (0) target = $region5
    $region4: #{tpu_custom_call.1} parent=1 // pred_region
      _
    $region5: #{tpu_custom_call.1} parent=1 // pred_fallthru
      _
    // Predicated region
    $region6: #{tpu_custom_call.1} parent=1 // pred_check
      _
    $region7: #{tpu_custom_call.1} parent=1 // pred_check_branch
      %21 = sbr.rel (0) target = $region9
    $region8: #{tpu_custom_call.1} parent=1 // pred_region
      _
    $region9: #{tpu_custom_call.1} parent=1 // pred_fallthru
      _
    // Predicated region
    $region10: #{tpu_custom_call.1} parent=1 // pred_check
      _
    $region11: #{tpu_custom_call.1} parent=1 // pred_check_branch
      %23 = sbr.rel (0) target = $region13
    $region12: #{tpu_custom_call.1} parent=1 // pred_region
      _
    $region13: #{tpu_custom_call.1} parent=1 // pred_fallthru
      _
    // Predicated region
    $region14: #{tpu_custom_call.1} parent=1 // pred_check
      _
    $region15: #{tpu_custom_call.1} parent=1 // pred_check_branch
      %25 = sbr.rel (0) target = $region17
    $region16: #{tpu_custom_call.1} parent=1 // pred_region
      _
    $region17: #{tpu_custom_call.1} parent=1 // pred_fallthru
      _
    // Predicated region
    $region18: #{tpu_custom_call.1} parent=1 // pred_check
      _
    $region19: #{tpu_custom_call.1} parent=1 // pred_check_branch
      %27 = sbr.rel (0) target = $region21
    $region20: #{tpu_custom_call.1} parent=1 // pred_region
      _
    $region21: #{tpu_custom_call.1} parent=1 // pred_fallthru
      _
    // Predicated region
    $region22: #{tpu_custom_call.1} parent=1 // pred_check
      _
    $region23: #{tpu_custom_call.1} parent=1 // pred_check_branch
      %29 = sbr.rel (0) target = $region25
    $region24: #{tpu_custom_call.1} parent=1 // pred_region
      _
    $region25: #{tpu_custom_call.1} parent=1 // pred_fallthru
      _
    // Predicated region
    $region26: #{tpu_custom_call.1} parent=1 // pred_check
      _
    $region27: #{tpu_custom_call.1} parent=1 // pred_check_branch
      %31 = sbr.rel (0) target = $region29
    $region28: #{tpu_custom_call.1} parent=1 // pred_region
      _
    $region29: #{tpu_custom_call.1} parent=1 // pred_fallthru
      _
    // Predicated region
    $region30: #{tpu_custom_call.1} parent=1 // pred_check
      _
    $region31: #{tpu_custom_call.1} parent=1 // pred_check_branch
      %33 = sbr.rel (0) target = $region33
    $region32: #{tpu_custom_call.1} parent=1 // pred_region
      _
    $region33: #{tpu_custom_call.1} parent=1 // pred_fallthru
      _
    // Predicated region
    $region34: #{tpu_custom_call.1} parent=1 // pred_check
      _
    $region35: #{tpu_custom_call.1} parent=1 // pred_check_branch
      %35 = sbr.rel (0) target = $region37
    $region36: #{tpu_custom_call.1} parent=1 // pred_region
      _
    $region37: #{tpu_custom_call.1} parent=1 // pred_fallthru
      _
    // Predicated region
    $region38: #{tpu_custom_call.1} parent=1 // pred_check
      _
    $region39: #{tpu_custom_call.1} parent=1 // pred_check_branch
      %37 = sbr.rel (0) target = $region41
    $region40: #{tpu_custom_call.1} parent=1 // pred_region
      _
    $region41: #{tpu_custom_call.1} parent=1 // pred_fallthru
      _
    // Predicated region
    $region42: #{tpu_custom_call.1} parent=1 // pred_check
      _
    $region43: #{tpu_custom_call.1} parent=1 // pred_check_branch
      %39 = sbr.rel (0) target = $region45
    $region44: #{tpu_custom_call.1} parent=1 // pred_region
      _
    $region45: #{tpu_custom_call.1} parent=1 // pred_fallthru
      _
    // Predicated region
    $region46: #{tpu_custom_call.1} parent=1 // pred_check
      _
    $region47: #{tpu_custom_call.1} parent=1 // pred_check_branch
      %41 = sbr.rel (0) target = $region49
    $region48: #{tpu_custom_call.1} parent=1 // pred_region
      _
    $region49: #{tpu_custom_call.1} parent=1 // pred_fallthru
      _
    %v42 = vld [vmem:[%s1] sm:$0x1]
    %vm43 = vcmp.eq.s32.totalorder %v42, 0
    %v44 = vsel %vm43, 1, 0
    %v45 = vcvt.s32.f32 %v44
    %vm46 = vcmp.eq.s32.totalorder %v42, 1
    %v47 = vsel %vm46, 1, 0
    %v48 = vcvt.s32.f32 %v47
    %vm49 = vcmp.eq.s32.totalorder %v42, 2
    %v50 = vsel %vm49, 1, 0
    %v51 = vcvt.s32.f32 %v50
    %v52 = vld [vmem:[%s0] sm:$0xff]
    %v53 = vld [vmem:[%s0 + $0x8] sm:$0xff]
    %v54 = vld [vmem:[%s2] sm:$0xff]
    %v55 = vld [vmem:[%s2 + $0x8] sm:$0xff]
    %v56 = vld [vmem:[%s2 + $0x10] sm:$0xff]
    %v57 = vld [vmem:[%s2 + $0x18] sm:$0xff]
    %v58 = vld [vmem:[%s2 + $0x20] sm:$0xff]
    %v59 = vld [vmem:[%s2 + $0x28] sm:$0xff]
    %v60 = vld [vmem:[%s2 + $0x30] sm:$0xff]
    %v61 = vld [vmem:[%s2 + $0x38] sm:$0xff]
    %v62 = vld [vmem:[%s2 + $0x40] sm:$0xff]
    %v63 = vld [vmem:[%s2 + $0x48] sm:$0xff]
    %v64 = vld [vmem:[%s2 + $0x50] sm:$0xff]
    %v65 = vld [vmem:[%s2 + $0x58] sm:$0xff]
    %v66 = vld [vmem:[%s3] sm:$0xff]
    %v67 = vld [vmem:[%s3 + $0x8] sm:$0xff]
    %v68 = vld [vmem:[%s3 + $0x10] sm:$0xff]
    %v69 = vld [vmem:[%s3 + $0x18] sm:$0xff]
    %v70 = vld [vmem:[%s3 + $0x20] sm:$0xff]
    %v71 = vld [vmem:[%s3 + $0x28] sm:$0xff]
    %v72 = vld [vmem:[%s3 + $0x30] sm:$0xff]
    %v73 = vld [vmem:[%s3 + $0x38] sm:$0xff]
    %v74 = vld [vmem:[%s3 + $0x40] sm:$0xff]
    %v75 = vld [vmem:[%s3 + $0x48] sm:$0xff]
    %v76 = vld [vmem:[%s3 + $0x50] sm:$0xff]
    %v77 = vld [vmem:[%s3 + $0x58] sm:$0xff]
    %79 = vset.pattern.permute.xlu0 0
    %80 = vperm.xlu0 %79, %v66
    %v81 = vpop.permute.xlu0 %80
    %84 = vset.pattern.permute.xlu0 0
    %85 = vperm.xlu0 %84, %v67
    %v86 = vpop.permute.xlu0 %85
    %89 = vset.pattern.permute.xlu0 0
    %90 = vperm.xlu0 %89, %v68
    %v91 = vpop.permute.xlu0 %90
    %94 = vset.pattern.permute.xlu0 0
    %95 = vperm.xlu0 %94, %v69
    %v96 = vpop.permute.xlu0 %95
    %99 = vset.pattern.permute.xlu0 0
    %100 = vperm.xlu0 %99, %v70
    %v101 = vpop.permute.xlu0 %100
    %104 = vset.pattern.permute.xlu0 0
    %105 = vperm.xlu0 %104, %v71
    %v106 = vpop.permute.xlu0 %105
    %109 = vset.pattern.permute.xlu0 0
    %110 = vperm.xlu0 %109, %v72
    %v111 = vpop.permute.xlu0 %110
    %114 = vset.pattern.permute.xlu0 0
    %115 = vperm.xlu0 %114, %v73
    %v116 = vpop.permute.xlu0 %115
    %119 = vset.pattern.permute.xlu0 0
    %120 = vperm.xlu0 %119, %v74
    %v121 = vpop.permute.xlu0 %120
    %124 = vset.pattern.permute.xlu0 0
    %125 = vperm.xlu0 %124, %v75
    %v126 = vpop.permute.xlu0 %125
    %129 = vset.pattern.permute.xlu0 0
    %130 = vperm.xlu0 %129, %v76
    %v131 = vpop.permute.xlu0 %130
    %134 = vset.pattern.permute.xlu0 0
    %135 = vperm.xlu0 %134, %v77
    %v136 = vpop.permute.xlu0 %135
    %vm138 = vcmask 130048
    %v140 = vsel %vm138, %v54, 0
    %v143 = vsel %vm138, %v55, 0
    %v146 = vsel %vm138, %v56, 0
    %v149 = vsel %vm138, %v57, 0
    %v152 = vsel %vm138, %v58, 0
    %v155 = vsel %vm138, %v59, 0
    %v158 = vsel %vm138, %v60, 0
    %v161 = vsel %vm138, %v61, 0
    %v164 = vsel %vm138, %v62, 0
    %v167 = vsel %vm138, %v63, 0
    %v170 = vsel %vm138, %v64, 0
    %v173 = vsel %vm138, %v65, 0
    %175 = vmatpush.msra.mxu0 0.0
    %176 = vmatpush.msra.mxu0 0.0
    %177 = vmatpush.msra.mxu0 0.0
    %178 = vmatpush.msra.mxu0 0.0
    %179 = vmatpush.msra.mxu0 0.0
    %180 = vmatpush.msra.mxu0 0.0
    %181 = vmatpush.msra.mxu0 0.0
    %182 = vmatpush.msra.mxu0 0.0
    %183 = vmatpush.msra.mxu0 0.0
    %184 = vmatpush.msra.mxu0 0.0
    %185 = vmatpush.msra.mxu0 0.0
    %186 = vmatpush.msra.mxu0 0.0
    %187 = vmatpush.msra.mxu0 0.0
    %188 = vmatpush.msra.mxu0 0.0
    %189 = vmatpush.msra.mxu0 %v53
    %190 = vmatpush.msra.mxu0 %v52
    %191 = vmatmul.f32.gmra.mxu0 %v140
    %v192 = vpop.f32.mrf.mxu0
    %v193 = vadd.f32 %v81, %v192
    %194 = vmatmul.f32.gmra.mxu0 %v143
    %v195 = vpop.f32.mrf.mxu0
    %v196 = vadd.f32 %v86, %v195
    %197 = vmatmul.f32.gmra.mxu0 %v146
    %v198 = vpop.f32.mrf.mxu0
    %v199 = vadd.f32 %v91, %v198
    %200 = vmatmul.f32.gmra.mxu0 %v149
    %v201 = vpop.f32.mrf.mxu0
    %v202 = vadd.f32 %v96, %v201
    %203 = vmatmul.f32.gmra.mxu0 %v152
    %v204 = vpop.f32.mrf.mxu0
    %v205 = vadd.f32 %v101, %v204
    %206 = vmatmul.f32.gmra.mxu0 %v155
    %v207 = vpop.f32.mrf.mxu0
    %v208 = vadd.f32 %v106, %v207
    %209 = vmatmul.f32.gmra.mxu0 %v158
    %v210 = vpop.f32.mrf.mxu0
    %v211 = vadd.f32 %v111, %v210
    %212 = vmatmul.f32.gmra.mxu0 %v161
    %v213 = vpop.f32.mrf.mxu0
    %v214 = vadd.f32 %v116, %v213
    %215 = vmatmul.f32.gmra.mxu0 %v164
    %v216 = vpop.f32.mrf.mxu0
    %v217 = vadd.f32 %v121, %v216
    %218 = vmatmul.f32.gmra.mxu0 %v167
    %v219 = vpop.f32.mrf.mxu0
    %v220 = vadd.f32 %v126, %v219
    %221 = vmatmul.f32.gmra.mxu0 %v170
    %v222 = vpop.f32.mrf.mxu0
    %v223 = vadd.f32 %v131, %v222
    %224 = vmatmul.f32.gmra.mxu0 %v173
    %v225 = vpop.f32.mrf.mxu0
    %v226 = vadd.f32 %v136, %v225
    %227 = vdwg.mxu0
    %v229 = vperm.slane %v45, 0
    %v231 = vmul.f32 %v229, %v193
    %v232 = vmul.f32 %v229, %v196
    %v233 = vmul.f32 %v229, %v199
    %v234 = vmul.f32 %v229, %v202
    %v236 = vperm.slane %v48, 0
    %v238 = vmul.f32 %v236, %v205
    %v239 = vmul.f32 %v236, %v208
    %v240 = vmul.f32 %v236, %v211
    %v241 = vmul.f32 %v236, %v214
    %v242 = vadd.f32 %v231, %v238
    %v243 = vadd.f32 %v232, %v239
    %v244 = vadd.f32 %v233, %v240
    %v245 = vadd.f32 %v234, %v241
    %v247 = vperm.slane %v51, 0
    %v249 = vmul.f32 %v247, %v217
    %v250 = vmul.f32 %v247, %v220
    %v251 = vmul.f32 %v247, %v223
    %v252 = vmul.f32 %v247, %v226
    %v253 = vadd.f32 %v242, %v249
    %v254 = vadd.f32 %v243, %v250
    %v255 = vadd.f32 %v244, %v251
    %v256 = vadd.f32 %v245, %v252
    %v257 = vld [vmem:[%s4] sm:$0xff]
    %v258 = vld [vmem:[%s4 + $0x8] sm:$0xff]
    %v259 = vld [vmem:[%s4 + $0x10] sm:$0xff]
    %v260 = vld [vmem:[%s4 + $0x18] sm:$0xff]
    %v261 = vld [vmem:[%s4 + $0x20] sm:$0xff]
    %v262 = vld [vmem:[%s4 + $0x28] sm:$0xff]
    %v263 = vld [vmem:[%s4 + $0x30] sm:$0xff]
    %v264 = vld [vmem:[%s4 + $0x38] sm:$0xff]
    %v265 = vld [vmem:[%s4 + $0x40] sm:$0xff]
    %v266 = vld [vmem:[%s4 + $0x48] sm:$0xff]
    %v267 = vld [vmem:[%s4 + $0x50] sm:$0xff]
    %v268 = vld [vmem:[%s4 + $0x58] sm:$0xff]
    %v269 = vld [vmem:[%s5] sm:$0xff]
    %v270 = vld [vmem:[%s5 + $0x8] sm:$0xff]
    %v271 = vld [vmem:[%s5 + $0x10] sm:$0xff]
    %v272 = vld [vmem:[%s5 + $0x18] sm:$0xff]
    %v273 = vld [vmem:[%s5 + $0x20] sm:$0xff]
    %v274 = vld [vmem:[%s5 + $0x28] sm:$0xff]
    %v275 = vld [vmem:[%s5 + $0x30] sm:$0xff]
    %v276 = vld [vmem:[%s5 + $0x38] sm:$0xff]
    %v277 = vld [vmem:[%s5 + $0x40] sm:$0xff]
    %v278 = vld [vmem:[%s5 + $0x48] sm:$0xff]
    %v279 = vld [vmem:[%s5 + $0x50] sm:$0xff]
    %v280 = vld [vmem:[%s5 + $0x58] sm:$0xff]
    %282 = vset.pattern.permute.xlu0 0
    %283 = vperm.xlu0 %282, %v257
    %v284 = vpop.permute.xlu0 %283
    %287 = vset.pattern.permute.xlu0 0
    %288 = vperm.xlu0 %287, %v258
    %v289 = vpop.permute.xlu0 %288
    %292 = vset.pattern.permute.xlu0 0
    %293 = vperm.xlu0 %292, %v259
    %v294 = vpop.permute.xlu0 %293
    %297 = vset.pattern.permute.xlu0 0
    %298 = vperm.xlu0 %297, %v260
    %v299 = vpop.permute.xlu0 %298
    %v301 = vmul.f32 %v229, %v284
    %v302 = vmul.f32 %v229, %v289
    %v303 = vmul.f32 %v229, %v294
    %v304 = vmul.f32 %v229, %v299
    %306 = vset.pattern.permute.xlu0 0
    %307 = vperm.xlu0 %306, %v269
    %v308 = vpop.permute.xlu0 %307
    %311 = vset.pattern.permute.xlu0 0
    %312 = vperm.xlu0 %311, %v270
    %v313 = vpop.permute.xlu0 %312
    %316 = vset.pattern.permute.xlu0 0
    %317 = vperm.xlu0 %316, %v271
    %v318 = vpop.permute.xlu0 %317
    %321 = vset.pattern.permute.xlu0 0
    %322 = vperm.xlu0 %321, %v272
    %v323 = vpop.permute.xlu0 %322
    %v325 = vmul.f32 %v229, %v308
    %v326 = vmul.f32 %v229, %v313
    %v327 = vmul.f32 %v229, %v318
    %v328 = vmul.f32 %v229, %v323
    %330 = vset.pattern.permute.xlu0 0
    %331 = vperm.xlu0 %330, %v261
    %v332 = vpop.permute.xlu0 %331
    %335 = vset.pattern.permute.xlu0 0
    %336 = vperm.xlu0 %335, %v262
    %v337 = vpop.permute.xlu0 %336
    %340 = vset.pattern.permute.xlu0 0
    %341 = vperm.xlu0 %340, %v263
    %v342 = vpop.permute.xlu0 %341
    %345 = vset.pattern.permute.xlu0 0
    %346 = vperm.xlu0 %345, %v264
    %v347 = vpop.permute.xlu0 %346
    %v349 = vmul.f32 %v236, %v332
    %v350 = vmul.f32 %v236, %v337
    %v351 = vmul.f32 %v236, %v342
    %v352 = vmul.f32 %v236, %v347
    %v353 = vadd.f32 %v301, %v349
    %v354 = vadd.f32 %v302, %v350
    %v355 = vadd.f32 %v303, %v351
    %v356 = vadd.f32 %v304, %v352
    %358 = vset.pattern.permute.xlu0 0
    %359 = vperm.xlu0 %358, %v273
    %v360 = vpop.permute.xlu0 %359
    %363 = vset.pattern.permute.xlu0 0
    %364 = vperm.xlu0 %363, %v274
    %v365 = vpop.permute.xlu0 %364
    %368 = vset.pattern.permute.xlu0 0
    %369 = vperm.xlu0 %368, %v275
    %v370 = vpop.permute.xlu0 %369
    %373 = vset.pattern.permute.xlu0 0
    %374 = vperm.xlu0 %373, %v276
    %v375 = vpop.permute.xlu0 %374
    %v377 = vmul.f32 %v236, %v360
    %v378 = vmul.f32 %v236, %v365
    %v379 = vmul.f32 %v236, %v370
    %v380 = vmul.f32 %v236, %v375
    %v381 = vadd.f32 %v325, %v377
    %v382 = vadd.f32 %v326, %v378
    %v383 = vadd.f32 %v327, %v379
    %v384 = vadd.f32 %v328, %v380
    %386 = vset.pattern.permute.xlu0 0
    %387 = vperm.xlu0 %386, %v265
    %v388 = vpop.permute.xlu0 %387
    %391 = vset.pattern.permute.xlu0 0
    %392 = vperm.xlu0 %391, %v266
    %v393 = vpop.permute.xlu0 %392
    %396 = vset.pattern.permute.xlu0 0
    %397 = vperm.xlu0 %396, %v267
    %v398 = vpop.permute.xlu0 %397
    %401 = vset.pattern.permute.xlu0 0
    %402 = vperm.xlu0 %401, %v268
    %v403 = vpop.permute.xlu0 %402
    %v405 = vmul.f32 %v247, %v388
    %v406 = vmul.f32 %v247, %v393
    %v407 = vmul.f32 %v247, %v398
    %v408 = vmul.f32 %v247, %v403
    %v409 = vadd.f32 %v353, %v405
    %v410 = vadd.f32 %v354, %v406
    %v411 = vadd.f32 %v355, %v407
    %v412 = vadd.f32 %v356, %v408
    %414 = vset.pattern.permute.xlu0 0
    %415 = vperm.xlu0 %414, %v277
    %v416 = vpop.permute.xlu0 %415
    %419 = vset.pattern.permute.xlu0 0
    %420 = vperm.xlu0 %419, %v278
    %v421 = vpop.permute.xlu0 %420
    %424 = vset.pattern.permute.xlu0 0
    %425 = vperm.xlu0 %424, %v279
    %v426 = vpop.permute.xlu0 %425
    %429 = vset.pattern.permute.xlu0 0
    %430 = vperm.xlu0 %429, %v280
    %v431 = vpop.permute.xlu0 %430
    %v433 = vmul.f32 %v247, %v416
    %v434 = vmul.f32 %v247, %v421
    %v435 = vmul.f32 %v247, %v426
    %v436 = vmul.f32 %v247, %v431
    %v437 = vadd.f32 %v381, %v433
    %v438 = vadd.f32 %v382, %v434
    %v439 = vadd.f32 %v383, %v435
    %v440 = vadd.f32 %v384, %v436
    %v441 = vadd.f32 %v253, %v254
    %v442 = vadd.f32 %v441, %v255
    %v443 = vadd.f32 %v442, %v256
    %v444 = vrot.slane %v443, 4
    %v445 = vadd.f32 %v443, %v444
    %v446 = vrot.slane %v445, 2
    %v447 = vadd.f32 %v445, %v446
    %v448 = vrot.slane %v447, 1
    %v449 = vadd.f32 %v447, %v448
    %v450 = vrcp.pop 32.0
    %v451 = vmul.f32 32.0, %v450
    %v452 = vsub.f32 1.0, %v451
    %v453 = vmul.f32 %v450, %v452
    %v454 = vadd.f32 %v450, %v453
    %vm455 = vweird.f32 %v450
    %v456 = vsel %vm455, %v450, %v454
    %v457 = vmul.f32 %v449, %v456
    %v458 = vsub.f32 %v253, %v457
    %v459 = vsub.f32 %v254, %v457
    %v460 = vsub.f32 %v255, %v457
    %v461 = vsub.f32 %v256, %v457
    %v462 = vmul.f32 %v458, %v458
    %v463 = vmul.f32 %v459, %v459
    %v464 = vmul.f32 %v460, %v460
    %v465 = vmul.f32 %v461, %v461
    %v466 = vadd.f32 %v462, %v463
    %v467 = vadd.f32 %v466, %v464
    %v468 = vadd.f32 %v467, %v465
    %v469 = vrot.slane %v468, 4
    %v470 = vadd.f32 %v468, %v469
    %v471 = vrot.slane %v470, 2
    %v472 = vadd.f32 %v470, %v471
    %v473 = vrot.slane %v472, 1
    %v474 = vadd.f32 %v472, %v473
    %v475 = vmul.f32 %v474, %v456
    %v476 = vadd.f32 %v475, 1e-05
    %v477 = vrsqrt.pop %v476
    %v478 = vmul.f32 %v477, %v476
    %v479 = vmul.f32 %v478, %v477
    %v480 = vmul.f32 0.5, %v479
    %v481 = vsub.f32 1.5, %v480
    %v482 = vmul.f32 %v477, %v481
    %vm483 = vweird.f32 %v476
    %vm484 = vweird.f32 %v477
    %vm485 = vmor %vm483, %vm484
    %v486 = vsel %vm485, %v477, %v482
    %v487 = vmul.f32 %v458, %v486
    %v488 = vmul.f32 %v459, %v486
    %v489 = vmul.f32 %v460, %v486
    %v490 = vmul.f32 %v461, %v486
    %v491 = vmul.f32 %v487, %v409
    %v492 = vmul.f32 %v488, %v410
    %v493 = vmul.f32 %v489, %v411
    %v494 = vmul.f32 %v490, %v412
    %v495 = vadd.f32 %v491, %v437
    %v496 = vadd.f32 %v492, %v438
    %v497 = vadd.f32 %v493, %v439
    %v498 = vadd.f32 %v494, %v440
    %vm499 = vcmp.gt.f32.partialorder %v495, 0.0
    %vm500 = vcmp.gt.f32.partialorder %v496, 0.0
    %vm501 = vcmp.gt.f32.partialorder %v497, 0.0
    %vm502 = vcmp.gt.f32.partialorder %v498, 0.0
    %v503 = vmul.f32 %v495, 0.01
    %v504 = vmul.f32 %v496, 0.01
    %v505 = vmul.f32 %v497, 0.01
    %v506 = vmul.f32 %v498, 0.01
    %v507 = vsel %vm499, %v495, %v503
    %v508 = vsel %vm500, %v496, %v504
    %v509 = vsel %vm501, %v497, %v505
    %v510 = vsel %vm502, %v498, %v506
    %v511 = vld [vmem:[%s6] sm:$0xff]
    %v512 = vld [vmem:[%s6 + $0x8] sm:$0xff]
    %v513 = vld [vmem:[%s6 + $0x10] sm:$0xff]
    %v514 = vld [vmem:[%s6 + $0x18] sm:$0xff]
    %v515 = vld [vmem:[%s6 + $0x20] sm:$0xff]
    %v516 = vld [vmem:[%s6 + $0x28] sm:$0xff]
    %v517 = vld [vmem:[%s6 + $0x30] sm:$0xff]
    %v518 = vld [vmem:[%s6 + $0x38] sm:$0xff]
    %v519 = vld [vmem:[%s6 + $0x40] sm:$0xff]
    %v520 = vld [vmem:[%s6 + $0x48] sm:$0xff]
    %v521 = vld [vmem:[%s6 + $0x50] sm:$0xff]
    %v522 = vld [vmem:[%s6 + $0x58] sm:$0xff]
    %v523 = vld [vmem:[%s7] sm:$0xff]
    %v524 = vld [vmem:[%s7 + $0x8] sm:$0xff]
    %v525 = vld [vmem:[%s7 + $0x10] sm:$0xff]
    %v526 = vld [vmem:[%s7 + $0x18] sm:$0xff]
    %v527 = vld [vmem:[%s7 + $0x20] sm:$0xff]
    %v528 = vld [vmem:[%s7 + $0x28] sm:$0xff]
    %v529 = vld [vmem:[%s7 + $0x30] sm:$0xff]
    %v530 = vld [vmem:[%s7 + $0x38] sm:$0xff]
    %v531 = vld [vmem:[%s7 + $0x40] sm:$0xff]
    %v532 = vld [vmem:[%s7 + $0x48] sm:$0xff]
    %v533 = vld [vmem:[%s7 + $0x50] sm:$0xff]
    %v534 = vld [vmem:[%s7 + $0x58] sm:$0xff]
    %536 = vset.pattern.permute.xlu0 0
    %537 = vperm.xlu0 %536, %v523
    %v538 = vpop.permute.xlu0 %537
    %541 = vset.pattern.permute.xlu0 0
    %542 = vperm.xlu0 %541, %v524
    %v543 = vpop.permute.xlu0 %542
    %546 = vset.pattern.permute.xlu0 0
    %547 = vperm.xlu0 %546, %v525
    %v548 = vpop.permute.xlu0 %547
    %551 = vset.pattern.permute.xlu0 0
    %552 = vperm.xlu0 %551, %v526
    %v553 = vpop.permute.xlu0 %552
    %556 = vset.pattern.permute.xlu0 0
    %557 = vperm.xlu0 %556, %v527
    %v558 = vpop.permute.xlu0 %557
    %561 = vset.pattern.permute.xlu0 0
    %562 = vperm.xlu0 %561, %v528
    %v563 = vpop.permute.xlu0 %562
    %566 = vset.pattern.permute.xlu0 0
    %567 = vperm.xlu0 %566, %v529
    %v568 = vpop.permute.xlu0 %567
    %571 = vset.pattern.permute.xlu0 0
    %572 = vperm.xlu0 %571, %v530
    %v573 = vpop.permute.xlu0 %572
    %576 = vset.pattern.permute.xlu0 0
    %577 = vperm.xlu0 %576, %v531
    %v578 = vpop.permute.xlu0 %577
    %581 = vset.pattern.permute.xlu0 0
    %582 = vperm.xlu0 %581, %v532
    %v583 = vpop.permute.xlu0 %582
    %586 = vset.pattern.permute.xlu0 0
    %587 = vperm.xlu0 %586, %v533
    %v588 = vpop.permute.xlu0 %587
    %591 = vset.pattern.permute.xlu0 0
    %592 = vperm.xlu0 %591, %v534
    %v593 = vpop.permute.xlu0 %592
    %vm595 = vcmask 261120
    %v597 = vsel %vm595, %v511, 0
    %v600 = vsel %vm595, %v512, 0
    %v603 = vsel %vm595, %v513, 0
    %v606 = vsel %vm595, %v514, 0
    %v609 = vsel %vm595, %v515, 0
    %v612 = vsel %vm595, %v516, 0
    %v615 = vsel %vm595, %v517, 0
    %v618 = vsel %vm595, %v518, 0
    %v621 = vsel %vm595, %v519, 0
    %v624 = vsel %vm595, %v520, 0
    %v627 = vsel %vm595, %v521, 0
    %v630 = vsel %vm595, %v522, 0
    %632 = vmatpush.msra.mxu0 0.0
    %633 = vmatpush.msra.mxu0 0.0
    %634 = vmatpush.msra.mxu0 0.0
    %635 = vmatpush.msra.mxu0 0.0
    %636 = vmatpush.msra.mxu0 0.0
    %637 = vmatpush.msra.mxu0 0.0
    %638 = vmatpush.msra.mxu0 0.0
    %639 = vmatpush.msra.mxu0 0.0
    %640 = vmatpush.msra.mxu0 0.0
    %641 = vmatpush.msra.mxu0 0.0
    %642 = vmatpush.msra.mxu0 0.0
    %643 = vmatpush.msra.mxu0 0.0
    %644 = vmatpush.msra.mxu0 %v510
    %645 = vmatpush.msra.mxu0 %v509
    %646 = vmatpush.msra.mxu0 %v508
    %647 = vmatpush.msra.mxu0 %v507
    %648 = vmatmul.f32.gmra.mxu0 %v597
    %v649 = vpop.f32.mrf.mxu0
    %v650 = vadd.f32 %v538, %v649
    %651 = vmatmul.f32.gmra.mxu0 %v600
    %v652 = vpop.f32.mrf.mxu0
    %v653 = vadd.f32 %v543, %v652
    %654 = vmatmul.f32.gmra.mxu0 %v603
    %v655 = vpop.f32.mrf.mxu0
    %v656 = vadd.f32 %v548, %v655
    %657 = vmatmul.f32.gmra.mxu0 %v606
    %v658 = vpop.f32.mrf.mxu0
    %v659 = vadd.f32 %v553, %v658
    %660 = vmatmul.f32.gmra.mxu0 %v609
    %v661 = vpop.f32.mrf.mxu0
    %v662 = vadd.f32 %v558, %v661
    %663 = vmatmul.f32.gmra.mxu0 %v612
    %v664 = vpop.f32.mrf.mxu0
    %v665 = vadd.f32 %v563, %v664
    %666 = vmatmul.f32.gmra.mxu0 %v615
    %v667 = vpop.f32.mrf.mxu0
    %v668 = vadd.f32 %v568, %v667
    %669 = vmatmul.f32.gmra.mxu0 %v618
    %v670 = vpop.f32.mrf.mxu0
    %v671 = vadd.f32 %v573, %v670
    %672 = vmatmul.f32.gmra.mxu0 %v621
    %v673 = vpop.f32.mrf.mxu0
    %v674 = vadd.f32 %v578, %v673
    %675 = vmatmul.f32.gmra.mxu0 %v624
    %v676 = vpop.f32.mrf.mxu0
    %v677 = vadd.f32 %v583, %v676
    %678 = vmatmul.f32.gmra.mxu0 %v627
    %v679 = vpop.f32.mrf.mxu0
    %v680 = vadd.f32 %v588, %v679
    %681 = vmatmul.f32.gmra.mxu0 %v630
    %v682 = vpop.f32.mrf.mxu0
    %v683 = vadd.f32 %v593, %v682
    %684 = vdwg.mxu0
    %v685 = vmul.f32 %v229, %v650
    %v686 = vmul.f32 %v229, %v653
    %v687 = vmul.f32 %v229, %v656
    %v688 = vmul.f32 %v229, %v659
    %v689 = vmul.f32 %v236, %v662
    %v690 = vmul.f32 %v236, %v665
    %v691 = vmul.f32 %v236, %v668
    %v692 = vmul.f32 %v236, %v671
    %v693 = vadd.f32 %v685, %v689
    %v694 = vadd.f32 %v686, %v690
    %v695 = vadd.f32 %v687, %v691
    %v696 = vadd.f32 %v688, %v692
    %v697 = vmul.f32 %v247, %v674
    %v698 = vmul.f32 %v247, %v677
    %v699 = vmul.f32 %v247, %v680
    %v700 = vmul.f32 %v247, %v683
    %v701 = vadd.f32 %v693, %v697
    %v702 = vadd.f32 %v694, %v698
    %v703 = vadd.f32 %v695, %v699
    %v704 = vadd.f32 %v696, %v700
    %v705 = vld [vmem:[%s8] sm:$0xff]
    %v706 = vld [vmem:[%s8 + $0x8] sm:$0xff]
    %v707 = vld [vmem:[%s8 + $0x10] sm:$0xff]
    %v708 = vld [vmem:[%s8 + $0x18] sm:$0xff]
    %v709 = vld [vmem:[%s8 + $0x20] sm:$0xff]
    %v710 = vld [vmem:[%s8 + $0x28] sm:$0xff]
    %v711 = vld [vmem:[%s8 + $0x30] sm:$0xff]
    %v712 = vld [vmem:[%s8 + $0x38] sm:$0xff]
    %v713 = vld [vmem:[%s8 + $0x40] sm:$0xff]
    %v714 = vld [vmem:[%s8 + $0x48] sm:$0xff]
    %v715 = vld [vmem:[%s8 + $0x50] sm:$0xff]
    %v716 = vld [vmem:[%s8 + $0x58] sm:$0xff]
    %v717 = vld [vmem:[%s9] sm:$0xff]
    %v718 = vld [vmem:[%s9 + $0x8] sm:$0xff]
    %v719 = vld [vmem:[%s9 + $0x10] sm:$0xff]
    %v720 = vld [vmem:[%s9 + $0x18] sm:$0xff]
    %v721 = vld [vmem:[%s9 + $0x20] sm:$0xff]
    %v722 = vld [vmem:[%s9 + $0x28] sm:$0xff]
    %v723 = vld [vmem:[%s9 + $0x30] sm:$0xff]
    %v724 = vld [vmem:[%s9 + $0x38] sm:$0xff]
    %v725 = vld [vmem:[%s9 + $0x40] sm:$0xff]
    %v726 = vld [vmem:[%s9 + $0x48] sm:$0xff]
    %v727 = vld [vmem:[%s9 + $0x50] sm:$0xff]
    %v728 = vld [vmem:[%s9 + $0x58] sm:$0xff]
    %730 = vset.pattern.permute.xlu0 0
    %731 = vperm.xlu0 %730, %v705
    %v732 = vpop.permute.xlu0 %731
    %735 = vset.pattern.permute.xlu0 0
    %736 = vperm.xlu0 %735, %v706
    %v737 = vpop.permute.xlu0 %736
    %740 = vset.pattern.permute.xlu0 0
    %741 = vperm.xlu0 %740, %v707
    %v742 = vpop.permute.xlu0 %741
    %745 = vset.pattern.permute.xlu0 0
    %746 = vperm.xlu0 %745, %v708
    %v747 = vpop.permute.xlu0 %746
    %v749 = vmul.f32 %v229, %v732
    %v750 = vmul.f32 %v229, %v737
    %v751 = vmul.f32 %v229, %v742
    %v752 = vmul.f32 %v229, %v747
    %754 = vset.pattern.permute.xlu0 0
    %755 = vperm.xlu0 %754, %v717
    %v756 = vpop.permute.xlu0 %755
    %759 = vset.pattern.permute.xlu0 0
    %760 = vperm.xlu0 %759, %v718
    %v761 = vpop.permute.xlu0 %760
    %764 = vset.pattern.permute.xlu0 0
    %765 = vperm.xlu0 %764, %v719
    %v766 = vpop.permute.xlu0 %765
    %769 = vset.pattern.permute.xlu0 0
    %770 = vperm.xlu0 %769, %v720
    %v771 = vpop.permute.xlu0 %770
    %v773 = vmul.f32 %v229, %v756
    %v774 = vmul.f32 %v229, %v761
    %v775 = vmul.f32 %v229, %v766
    %v776 = vmul.f32 %v229, %v771
    %778 = vset.pattern.permute.xlu0 0
    %779 = vperm.xlu0 %778, %v709
    %v780 = vpop.permute.xlu0 %779
    %783 = vset.pattern.permute.xlu0 0
    %784 = vperm.xlu0 %783, %v710
    %v785 = vpop.permute.xlu0 %784
    %788 = vset.pattern.permute.xlu0 0
    %789 = vperm.xlu0 %788, %v711
    %v790 = vpop.permute.xlu0 %789
    %793 = vset.pattern.permute.xlu0 0
    %794 = vperm.xlu0 %793, %v712
    %v795 = vpop.permute.xlu0 %794
    %v797 = vmul.f32 %v236, %v780
    %v798 = vmul.f32 %v236, %v785
    %v799 = vmul.f32 %v236, %v790
    %v800 = vmul.f32 %v236, %v795
    %v801 = vadd.f32 %v749, %v797
    %v802 = vadd.f32 %v750, %v798
    %v803 = vadd.f32 %v751, %v799
    %v804 = vadd.f32 %v752, %v800
    %806 = vset.pattern.permute.xlu0 0
    %807 = vperm.xlu0 %806, %v721
    %v808 = vpop.permute.xlu0 %807
    %811 = vset.pattern.permute.xlu0 0
    %812 = vperm.xlu0 %811, %v722
    %v813 = vpop.permute.xlu0 %812
    %816 = vset.pattern.permute.xlu0 0
    %817 = vperm.xlu0 %816, %v723
    %v818 = vpop.permute.xlu0 %817
    %821 = vset.pattern.permute.xlu0 0
    %822 = vperm.xlu0 %821, %v724
    %v823 = vpop.permute.xlu0 %822
    %v825 = vmul.f32 %v236, %v808
    %v826 = vmul.f32 %v236, %v813
    %v827 = vmul.f32 %v236, %v818
    %v828 = vmul.f32 %v236, %v823
    %v829 = vadd.f32 %v773, %v825
    %v830 = vadd.f32 %v774, %v826
    %v831 = vadd.f32 %v775, %v827
    %v832 = vadd.f32 %v776, %v828
    %834 = vset.pattern.permute.xlu0 0
    %835 = vperm.xlu0 %834, %v713
    %v836 = vpop.permute.xlu0 %835
    %839 = vset.pattern.permute.xlu0 0
    %840 = vperm.xlu0 %839, %v714
    %v841 = vpop.permute.xlu0 %840
    %844 = vset.pattern.permute.xlu0 0
    %845 = vperm.xlu0 %844, %v715
    %v846 = vpop.permute.xlu0 %845
    %849 = vset.pattern.permute.xlu0 0
    %850 = vperm.xlu0 %849, %v716
    %v851 = vpop.permute.xlu0 %850
    %v853 = vmul.f32 %v247, %v836
    %v854 = vmul.f32 %v247, %v841
    %v855 = vmul.f32 %v247, %v846
    %v856 = vmul.f32 %v247, %v851
    %v857 = vadd.f32 %v801, %v853
    %v858 = vadd.f32 %v802, %v854
    %v859 = vadd.f32 %v803, %v855
    %v860 = vadd.f32 %v804, %v856
    %862 = vset.pattern.permute.xlu0 0
    %863 = vperm.xlu0 %862, %v725
    %v864 = vpop.permute.xlu0 %863
    %867 = vset.pattern.permute.xlu0 0
    %868 = vperm.xlu0 %867, %v726
    %v869 = vpop.permute.xlu0 %868
    %872 = vset.pattern.permute.xlu0 0
    %873 = vperm.xlu0 %872, %v727
    %v874 = vpop.permute.xlu0 %873
    %877 = vset.pattern.permute.xlu0 0
    %878 = vperm.xlu0 %877, %v728
    %v879 = vpop.permute.xlu0 %878
    %v881 = vmul.f32 %v247, %v864
    %v882 = vmul.f32 %v247, %v869
    %v883 = vmul.f32 %v247, %v874
    %v884 = vmul.f32 %v247, %v879
    %v885 = vadd.f32 %v829, %v881
    %v886 = vadd.f32 %v830, %v882
    %v887 = vadd.f32 %v831, %v883
    %v888 = vadd.f32 %v832, %v884
    %v889 = vadd.f32 %v701, %v702
    %v890 = vadd.f32 %v889, %v703
    %v891 = vadd.f32 %v890, %v704
    %v892 = vrot.slane %v891, 4
    %v893 = vadd.f32 %v891, %v892
    %v894 = vrot.slane %v893, 2
    %v895 = vadd.f32 %v893, %v894
    %v896 = vrot.slane %v895, 1
    %v897 = vadd.f32 %v895, %v896
    %v898 = vmul.f32 %v897, %v456
    %v899 = vsub.f32 %v701, %v898
    %v900 = vsub.f32 %v702, %v898
    %v901 = vsub.f32 %v703, %v898
    %v902 = vsub.f32 %v704, %v898
    %v903 = vmul.f32 %v899, %v899
    %v904 = vmul.f32 %v900, %v900
    %v905 = vmul.f32 %v901, %v901
    %v906 = vmul.f32 %v902, %v902
    %v907 = vadd.f32 %v903, %v904
    %v908 = vadd.f32 %v907, %v905
    %v909 = vadd.f32 %v908, %v906
    %v910 = vrot.slane %v909, 4
    %v911 = vadd.f32 %v909, %v910
    %v912 = vrot.slane %v911, 2
    %v913 = vadd.f32 %v911, %v912
    %v914 = vrot.slane %v913, 1
    %v915 = vadd.f32 %v913, %v914
    %v916 = vmul.f32 %v915, %v456
    %v917 = vadd.f32 %v916, 1e-05
    %v918 = vrsqrt.pop %v917
    %v919 = vmul.f32 %v918, %v917
    %v920 = vmul.f32 %v919, %v918
    %v921 = vmul.f32 0.5, %v920
    %v922 = vsub.f32 1.5, %v921
    %v923 = vmul.f32 %v918, %v922
    %vm924 = vweird.f32 %v917
    %vm925 = vweird.f32 %v918
    %vm926 = vmor %vm924, %vm925
    %v927 = vsel %vm926, %v918, %v923
    %v928 = vmul.f32 %v899, %v927
    %v929 = vmul.f32 %v900, %v927
    %v930 = vmul.f32 %v901, %v927
    %v931 = vmul.f32 %v902, %v927
    %v932 = vmul.f32 %v928, %v857
    %v933 = vmul.f32 %v929, %v858
    %v934 = vmul.f32 %v930, %v859
    %v935 = vmul.f32 %v931, %v860
    %v936 = vadd.f32 %v932, %v885
    %v937 = vadd.f32 %v933, %v886
    %v938 = vadd.f32 %v934, %v887
    %v939 = vadd.f32 %v935, %v888
    %vm940 = vcmp.gt.f32.partialorder %v936, 0.0
    %vm941 = vcmp.gt.f32.partialorder %v937, 0.0
    %vm942 = vcmp.gt.f32.partialorder %v938, 0.0
    %vm943 = vcmp.gt.f32.partialorder %v939, 0.0
    %v944 = vmul.f32 %v936, 0.01
    %v945 = vmul.f32 %v937, 0.01
    %v946 = vmul.f32 %v938, 0.01
    %v947 = vmul.f32 %v939, 0.01
    %v948 = vsel %vm940, %v936, %v944
    %v949 = vsel %vm941, %v937, %v945
    %v950 = vsel %vm942, %v938, %v946
    %v951 = vsel %vm943, %v939, %v947
    %v952 = vld [vmem:[%s10] sm:$0xff]
    %v953 = vld [vmem:[%s10 + $0x8] sm:$0xff]
    %v954 = vld [vmem:[%s10 + $0x10] sm:$0xff]
    %v955 = vld [vmem:[%s11] sm:$0xff]
    %v956 = vld [vmem:[%s11 + $0x8] sm:$0xff]
    %v957 = vld [vmem:[%s11 + $0x10] sm:$0xff]
    %959 = vset.pattern.permute.xlu0 0
    %960 = vperm.xlu0 %959, %v955
    %v961 = vpop.permute.xlu0 %960
    %964 = vset.pattern.permute.xlu0 0
    %965 = vperm.xlu0 %964, %v956
    %v966 = vpop.permute.xlu0 %965
    %969 = vset.pattern.permute.xlu0 0
    %970 = vperm.xlu0 %969, %v957
    %v971 = vpop.permute.xlu0 %970
    %v974 = vsel %vm595, %v952, 0
    %v977 = vsel %vm595, %v953, 0
    %v980 = vsel %vm595, %v954, 0
    %982 = vmatpush.msra.mxu0 0.0
    %983 = vmatpush.msra.mxu0 0.0
    %984 = vmatpush.msra.mxu0 0.0
    %985 = vmatpush.msra.mxu0 0.0
    %986 = vmatpush.msra.mxu0 0.0
    %987 = vmatpush.msra.mxu0 0.0
    %988 = vmatpush.msra.mxu0 0.0
    %989 = vmatpush.msra.mxu0 0.0
    %990 = vmatpush.msra.mxu0 0.0
    %991 = vmatpush.msra.mxu0 0.0
    %992 = vmatpush.msra.mxu0 0.0
    %993 = vmatpush.msra.mxu0 0.0
    %994 = vmatpush.msra.mxu0 %v951
    %995 = vmatpush.msra.mxu0 %v950
    %996 = vmatpush.msra.mxu0 %v949
    %997 = vmatpush.msra.mxu0 %v948
    %998 = vmatmul.f32.gmra.mxu0 %v974
    %v999 = vpop.f32.mrf.mxu0
    %v1000 = vadd.f32 %v961, %v999
    %1001 = vmatmul.f32.gmra.mxu0 %v977
    %v1002 = vpop.f32.mrf.mxu0
    %v1003 = vadd.f32 %v966, %v1002
    %1004 = vmatmul.f32.gmra.mxu0 %v980
    %v1005 = vpop.f32.mrf.mxu0
    %v1006 = vadd.f32 %v971, %v1005
    %1007 = vdwg.mxu0
    %v1008 = vmul.f32 %v229, %v1000
    %v1009 = vmul.f32 %v236, %v1003
    %v1010 = vadd.f32 %v1008, %v1009
    %v1011 = vmul.f32 %v247, %v1006
    %v1012 = vadd.f32 %v1010, %v1011
    %1013 = vst [vmem:[#allocation2] sm:$0xff] %v1012
    // Predicated region
    $region50: #{tpu_custom_call.1} parent=1 // pred_check
      _
    $region51: #{tpu_custom_call.1} parent=1 // pred_check_branch
      %1015 = sbr.rel (0) target = $region53
    $region52: #{tpu_custom_call.1} parent=1 // pred_region
      %1017 = vsyncadd [#allocation3], 0
      %s1019 = sshll.u32 [#allocation2], 4
      %s1020 = int_to_ptr.vmem [resolvable:$true] %s1019
      %s1021 = sshll.u32 %s12, 4
      %s1022 = int_to_ptr.hbm [resolvable:$true] %s1021
      %1024 = dma.vmem_to_hbm [thread:$0]  %s1020, 128, %s1022, [#allocation3]
    $region53: #{tpu_custom_call.1} parent=1 // pred_fallthru
      _
    // Predicated region
    $region54: #{tpu_custom_call.1} parent=1 // pred_check
      _
    $region55: #{tpu_custom_call.1} parent=1 // pred_check_branch
      %1026 = sbr.rel (0) target = $region57
    $region56: #{tpu_custom_call.1} parent=1 // pred_region
      %1028 = dma.done [#allocation3], 128
    $region57: #{tpu_custom_call.1} parent=1 // pred_fallthru
      _
    %1029 = vsyncpa [#allocation3], 1

</llo_original>
